<compile_context>
chip_gen: v7x
topology: tpu7x:2x2x1
jax: 0.10.0
libtpu: 0.0.40
codegen_flags: <defaults>
</compile_context>

<pallas_src>
import jax
import jax.numpy as jnp
from jax import lax
from jax.experimental import pallas as pl
from jax.experimental.pallas import tpu as pltpu


def _bgru_kernel(x_ref, gamma_ref, beta_ref,
                 wih_ref, bih_ref,
                 whh_f_ref, bhh_f_ref,
                 whh_b_ref, bhh_b_ref,
                 out_ref,
                 xg_f_ref, xg_b_ref):
    T, TB, D = x_ref.shape
    H = whh_f_ref.shape[0]
    H3 = 3 * H

    # ---- LayerNorm over last dim (eps=1e-5, biased variance), f32 on VPU ----
    x = x_ref[...]
    mu = jnp.mean(x, axis=-1, keepdims=True)
    var = jnp.mean((x - mu) * (x - mu), axis=-1, keepdims=True)
    xn = (x - mu) * lax.rsqrt(var + 1e-5)
    xn = xn * gamma_ref[...].reshape(1, 1, D) + beta_ref[...].reshape(1, 1, D)

    # ---- exact GELU (erf form, like F.gelu default), EUP erf ----
    inv_sqrt2 = jnp.float32(0.7071067811865475)
    y = 0.5 * xn * (1.0 + lax.erf(xn * inv_sqrt2))

    # ---- fused input->hidden gate pre-activations for BOTH directions ----
    # One (T*TB, D) @ (D, 6H) MXU pass; time-major so the reshape is free.
    y2 = y.reshape(T * TB, D)
    xg = jnp.dot(y2, wih_ref[...], preferred_element_type=jnp.float32) + bih_ref[...]
    xg = xg.reshape(T, TB, 2 * H3)
    # Stage into VMEM scratch so the LN/GELU/matmul intermediates can die
    # before the recurrence starts; loop reads are leading-axis ref indexes.
    xg_f_ref[...] = xg[:, :, 0:H3]
    xg_b_ref[...] = xg[:, :, H3:2 * H3]

    whh_f = whh_f_ref[...]
    bhh_f = bhh_f_ref[...]
    whh_b = whh_b_ref[...]
    bhh_b = bhh_b_ref[...]

    def gru_cell(xg_t, h, whh, bhh):
        hg = jnp.dot(h, whh, preferred_element_type=jnp.float32) + bhh
        r = jax.nn.sigmoid(xg_t[:, 0:H] + hg[:, 0:H])
        z = jax.nn.sigmoid(xg_t[:, H:2 * H] + hg[:, H:2 * H])
        n = jnp.tanh(xg_t[:, 2 * H:H3] + r * hg[:, 2 * H:H3])
        return (1.0 - z) * n + z * h

    # ---- interleaved forward + backward recurrence (two independent chains
    #      per iteration keep the MXU result path busy) ----
    def step(i, carry):
        h_f, h_b = carry
        tb = T - 1 - i
        h_f = gru_cell(xg_f_ref[i], h_f, whh_f, bhh_f)
        h_b = gru_cell(xg_b_ref[tb], h_b, whh_b, bhh_b)
        # Contiguous (TB, H) slab stores into the leading time axis.
        out_ref[i, :, 0:H] = h_f.astype(out_ref.dtype)
        out_ref[tb, :, H:2 * H] = h_b.astype(out_ref.dtype)
        return (h_f, h_b)

    h0 = jnp.zeros((TB, H), jnp.float32)
    lax.fori_loop(0, T, step, (h0, h0))


def _vmem_limit_bytes(T, TB, D, H):
    f32 = 4
    x_blk = T * TB * D * f32
    out_blk = T * TB * 2 * H * f32
    gate_scratch = 2 * T * TB * 3 * H * f32
    weights = (D * 6 * H + 2 * H * 3 * H + 4 * 3 * H + 2 * D) * f32
    # 2x for double-buffered pipelined blocks + headroom for LN/GELU/matmul
    # temporaries that are live alongside the gate scratch.
    est = 2 * (x_blk + out_blk + weights) + gate_scratch \
        + 3 * (x_blk + T * TB * 6 * H * f32)
    return int(min(max(2 * est, 16 << 20), 48 << 20))


def bgru_pallas(x, params, *, batch_tile=None):
    """x: (B, T, D) float32.  Returns (B, T, 2*H) float32 (eval-mode dropout)."""
    B, T, D = x.shape
    H = params["whh_f"].shape[0]
    H3 = 3 * H
    TB = batch_tile if batch_tile is not None else min(B, 128)
    grid = (pl.cdiv(B, TB),)

    # Fuse both directions' input->hidden weights into one (D, 6H) matmul.
    wih_fb = jnp.concatenate([params["wih_f"], params["wih_b"]], axis=1)
    bih_fb = jnp.concatenate([params["bih_f"], params["bih_b"]]).reshape(1, 6 * H)

    x_tm = jnp.swapaxes(x, 0, 1)  # (T, B, D) time-major for the kernel

    operands = (
        x_tm,
        params["gamma"].reshape(1, D),
        params["beta"].reshape(1, D),
        wih_fb,                              # (D, 6H)
        bih_fb,                              # (1, 6H)
        params["whh_f"],                     # (H, 3H)
        params["bhh_f"].reshape(1, H3),
        params["whh_b"],                     # (H, 3H)
        params["bhh_b"].reshape(1, H3),
    )

    const2 = lambda b: (0, 0)
    in_specs = [
        pl.BlockSpec((T, TB, D), lambda b: (0, b, 0)),   # x (time-major, batch-tiled)
        pl.BlockSpec((1, D), const2),                    # gamma
        pl.BlockSpec((1, D), const2),                    # beta
        pl.BlockSpec((D, 6 * H), const2),                # wih fused
        pl.BlockSpec((1, 6 * H), const2),                # bih fused
        pl.BlockSpec((H, H3), const2),                   # whh_f
        pl.BlockSpec((1, H3), const2),                   # bhh_f
        pl.BlockSpec((H, H3), const2),                   # whh_b
        pl.BlockSpec((1, H3), const2),                   # bhh_b
    ]
    out_spec = pl.BlockSpec((T, TB, 2 * H), lambda b: (0, b, 0))

    out_tm = pl.pallas_call(
        _bgru_kernel,
        grid=grid,
        in_specs=in_specs,
        out_specs=out_spec,
        out_shape=jax.ShapeDtypeStruct((T, B, 2 * H), jnp.float32),
        scratch_shapes=[
            pltpu.VMEM((T, TB, H3), jnp.float32),   # forward gate slab
            pltpu.VMEM((T, TB, H3), jnp.float32),   # backward gate slab
        ],
        compiler_params=pltpu.CompilerParams(
            dimension_semantics=("parallel",),
            vmem_limit_bytes=_vmem_limit_bytes(T, TB, D, H)),
    )(*operands)

    # Dropout == identity (eval mode).  Back to batch-major (B, T, 2H).
    return jnp.swapaxes(out_tm, 0, 1)


# ---------------- pure-JAX reference (for correctness check) ----------------
def bgru_ref(x, params):
    B, T, D = x.shape
    H = params["whh_f"].shape[0]

    mu = jnp.mean(x, axis=-1, keepdims=True)
    var = jnp.mean((x - mu) ** 2, axis=-1, keepdims=True)
    xn = (x - mu) * lax.rsqrt(var + 1e-5)
    xn = xn * params["gamma"] + params["beta"]
    y = 0.5 * xn * (1.0 + lax.erf(xn * 0.7071067811865475))

    def run_dir(wih, whh, bih, bhh, reverse):
        def step(h, x_t):
            gi = x_t @ wih + bih
            gh = h @ whh + bhh
            r = jax.nn.sigmoid(gi[:, :H] + gh[:, :H])
            z = jax.nn.sigmoid(gi[:, H:2 * H] + gh[:, H:2 * H])
            n = jnp.tanh(gi[:, 2 * H:] + r * gh[:, 2 * H:])
            h = (1.0 - z) * n + z * h
            return h, h
        ys = jnp.swapaxes(y, 0, 1)           # (T, B, D)
        if reverse:
            ys = ys[::-1]
        _, hs = lax.scan(step, jnp.zeros((B, H), jnp.float32), ys)
        if reverse:
            hs = hs[::-1]
        return jnp.swapaxes(hs, 0, 1)        # (B, T, H)

    of = run_dir(params["wih_f"], params["whh_f"], params["bih_f"], params["bhh_f"], False)
    ob = run_dir(params["wih_b"], params["whh_b"], params["bih_b"], params["bhh_b"], True)
    return jnp.concatenate([of, ob], axis=-1)


def init_params(key, rnn_dim, hidden):
    """Deterministic synthetic params. GRU weights use PyTorch's U(-1/sqrt(H), 1/sqrt(H))
    init; layouts are pre-transposed to (in, 3H) / (H, 3H) with gate order [r, z, n]."""
    k = 1.0 / jnp.sqrt(jnp.float32(hidden))
    keys = jax.random.split(key, 10)
    u = lambda kk, shape: jax.random.uniform(kk, shape, jnp.float32, -k, k)
    params = {
        "gamma": 1.0 + 0.1 * jax.random.normal(keys[0], (rnn_dim,), jnp.float32),
        "beta": 0.1 * jax.random.normal(keys[1], (rnn_dim,), jnp.float32),
        "wih_f": u(keys[2], (rnn_dim, 3 * hidden)),
        "whh_f": u(keys[3], (hidden, 3 * hidden)),
        "bih_f": u(keys[4], (3 * hidden,)),
        "bhh_f": u(keys[5], (3 * hidden,)),
        "wih_b": u(keys[6], (rnn_dim, 3 * hidden)),
        "whh_b": u(keys[7], (hidden, 3 * hidden)),
        "bih_b": u(keys[8], (3 * hidden,)),
        "bhh_b": u(keys[9], (3 * hidden,)),
    }
    return params


if __name__ == "__main__":
    B, T, D, H = 2, 8, 32, 32   # batch, seq, rnn_dim, hidden_size
    root = jax.random.PRNGKey(0)
    kx, kp = jax.random.split(root)
    x = jax.random.normal(kx, (B, T, D), jnp.float32)
    params = init_params(kp, D, H)

    out = jax.block_until_ready(bgru_pallas(x, params))
    ref = jax.block_until_ready(bgru_ref(x, params))

    assert out.shape == (B, T, 2 * H), out.shape
    err = float(jnp.max(jnp.abs(out - ref)))
    assert jnp.allclose(out, ref, atol=1e-4, rtol=1e-4), err
    print("KERNEL_OK")
</pallas_src>

<mosaic_0001>
module attributes {stable_mosaic.version = 11 : i64} {
  func.func @_bgru_kernel(%arg0: i32, %arg1: memref<8x2x32xf32, #tpu.memory_space<vmem>>, %arg2: memref<1x32xf32, #tpu.memory_space<vmem>>, %arg3: memref<1x32xf32, #tpu.memory_space<vmem>>, %arg4: memref<32x192xf32, #tpu.memory_space<vmem>>, %arg5: memref<1x192xf32, #tpu.memory_space<vmem>>, %arg6: memref<32x96xf32, #tpu.memory_space<vmem>>, %arg7: memref<1x96xf32, #tpu.memory_space<vmem>>, %arg8: memref<32x96xf32, #tpu.memory_space<vmem>>, %arg9: memref<1x96xf32, #tpu.memory_space<vmem>>, %arg10: memref<8x2x64xf32, #tpu.memory_space<vmem>>, %arg11: memref<8x2x96xf32, #tpu.memory_space<vmem>>, %arg12: memref<8x2x96xf32, #tpu.memory_space<vmem>>) attributes {dimension_semantics = [#tpu.dimension_semantics<parallel>], iteration_bounds = array<i64: 1>, scalar_prefetch = 0 : i64, scratch_operands = 2 : i64, tpu.core_type = #tpu.core_type<tc>, window_params = [{transform_indices = @transform_0, window_bounds = array<i64: 8, 2, 32>}, {pipeline_mode = #tpu.pipeline_mode<synchronous>, transform_indices = @transform_1, window_bounds = array<i64: 1, 32>}, {pipeline_mode = #tpu.pipeline_mode<synchronous>, transform_indices = @transform_2, window_bounds = array<i64: 1, 32>}, {pipeline_mode = #tpu.pipeline_mode<synchronous>, transform_indices = @transform_3, window_bounds = array<i64: 32, 192>}, {pipeline_mode = #tpu.pipeline_mode<synchronous>, transform_indices = @transform_4, window_bounds = array<i64: 1, 192>}, {pipeline_mode = #tpu.pipeline_mode<synchronous>, transform_indices = @transform_5, window_bounds = array<i64: 32, 96>}, {pipeline_mode = #tpu.pipeline_mode<synchronous>, transform_indices = @transform_6, window_bounds = array<i64: 1, 96>}, {pipeline_mode = #tpu.pipeline_mode<synchronous>, transform_indices = @transform_7, window_bounds = array<i64: 32, 96>}, {pipeline_mode = #tpu.pipeline_mode<synchronous>, transform_indices = @transform_8, window_bounds = array<i64: 1, 96>}, {transform_indices = @transform_9, window_bounds = array<i64: 8, 2, 64>}]} {
    %c0 = arith.constant 0 : index
    %c0_0 = arith.constant 0 : index
    %c0_1 = arith.constant 0 : index
    %0 = vector.load %arg1[%c0, %c0_0, %c0_1] : memref<8x2x32xf32, #tpu.memory_space<vmem>>, vector<8x2x32xf32>
    %cst = arith.constant dense<0.000000e+00> : vector<8x2xf32>
    %1 = vector.multi_reduction <add>, %0, %cst [2] : vector<8x2x32xf32> to vector<8x2xf32>
    %2 = vector.shape_cast %1 : vector<8x2xf32> to vector<8x2x1xf32>
    %cst_2 = arith.constant 3.200000e+01 : f32
    %3 = vector.broadcast %cst_2 : f32 to vector<8x2x1xf32>
    %4 = arith.divf %2, %3 : vector<8x2x1xf32>
    %5 = vector.broadcast %4 : vector<8x2x1xf32> to vector<8x2x32xf32>
    %6 = arith.subf %0, %5 : vector<8x2x32xf32>
    %7 = vector.broadcast %4 : vector<8x2x1xf32> to vector<8x2x32xf32>
    %8 = arith.subf %0, %7 : vector<8x2x32xf32>
    %9 = arith.mulf %6, %8 : vector<8x2x32xf32>
    %cst_3 = arith.constant dense<0.000000e+00> : vector<8x2xf32>
    %10 = vector.multi_reduction <add>, %9, %cst_3 [2] : vector<8x2x32xf32> to vector<8x2xf32>
    %11 = vector.shape_cast %10 : vector<8x2xf32> to vector<8x2x1xf32>
    %cst_4 = arith.constant 3.200000e+01 : f32
    %12 = vector.broadcast %cst_4 : f32 to vector<8x2x1xf32>
    %13 = arith.divf %11, %12 : vector<8x2x1xf32>
    %14 = vector.broadcast %4 : vector<8x2x1xf32> to vector<8x2x32xf32>
    %15 = arith.subf %0, %14 : vector<8x2x32xf32>
    %cst_5 = arith.constant 9.99999974E-6 : f32
    %16 = vector.broadcast %cst_5 : f32 to vector<8x2x1xf32>
    %17 = arith.addf %13, %16 : vector<8x2x1xf32>
    %18 = math.rsqrt %17 : vector<8x2x1xf32>
    %19 = vector.broadcast %18 : vector<8x2x1xf32> to vector<8x2x32xf32>
    %20 = arith.mulf %15, %19 : vector<8x2x32xf32>
    %c0_6 = arith.constant 0 : index
    %c0_7 = arith.constant 0 : index
    %21 = vector.load %arg2[%c0_6, %c0_7] : memref<1x32xf32, #tpu.memory_space<vmem>>, vector<1x32xf32>
    %22 = vector.shape_cast %21 : vector<1x32xf32> to vector<1x1x32xf32>
    %23 = vector.broadcast %22 : vector<1x1x32xf32> to vector<8x2x32xf32>
    %24 = arith.mulf %20, %23 : vector<8x2x32xf32>
    %c0_8 = arith.constant 0 : index
    %c0_9 = arith.constant 0 : index
    %25 = vector.load %arg3[%c0_8, %c0_9] : memref<1x32xf32, #tpu.memory_space<vmem>>, vector<1x32xf32>
    %26 = vector.shape_cast %25 : vector<1x32xf32> to vector<1x1x32xf32>
    %27 = vector.broadcast %26 : vector<1x1x32xf32> to vector<8x2x32xf32>
    %28 = arith.addf %24, %27 : vector<8x2x32xf32>
    %cst_10 = arith.constant 5.000000e-01 : f32
    %29 = vector.broadcast %cst_10 : f32 to vector<8x2x32xf32>
    %30 = arith.mulf %29, %28 : vector<8x2x32xf32>
    %cst_11 = arith.constant 0.707106769 : f32
    %31 = vector.broadcast %cst_11 : f32 to vector<8x2x32xf32>
    %32 = arith.mulf %28, %31 : vector<8x2x32xf32>
    %33 = math.erf %32 : vector<8x2x32xf32>
    %cst_12 = arith.constant 1.000000e+00 : f32
    %34 = vector.broadcast %cst_12 : f32 to vector<8x2x32xf32>
    %35 = arith.addf %34, %33 : vector<8x2x32xf32>
    %36 = arith.mulf %30, %35 : vector<8x2x32xf32>
    %37 = vector.shape_cast %36 : vector<8x2x32xf32> to vector<16x32xf32>
    %c0_13 = arith.constant 0 : index
    %c0_14 = arith.constant 0 : index
    %38 = vector.load %arg4[%c0_13, %c0_14] : memref<32x192xf32, #tpu.memory_space<vmem>>, vector<32x192xf32>
    %cst_15 = arith.constant dense<0.000000e+00> : vector<16x192xf32>
    %39 = tpu.matmul %37, %38, %cst_15 {dimension_numbers = #tpu.dot_dimension_numbers<[1], [0], [0], [1], [0, 0, 1, 1], [], []>} : vector<16x32xf32>, vector<32x192xf32>, vector<16x192xf32> -> vector<16x192xf32>
    %c0_16 = arith.constant 0 : index
    %c0_17 = arith.constant 0 : index
    %40 = vector.load %arg5[%c0_16, %c0_17] : memref<1x192xf32, #tpu.memory_space<vmem>>, vector<1x192xf32>
    %41 = vector.broadcast %40 : vector<1x192xf32> to vector<16x192xf32>
    %42 = arith.addf %39, %41 : vector<16x192xf32>
    %43 = vector.shape_cast %42 : vector<16x192xf32> to vector<8x2x192xf32>
    %44 = vector.extract_strided_slice %43 {offsets = [0, 0, 0], sizes = [8, 2, 96], strides = [1, 1, 1]} : vector<8x2x192xf32> to vector<8x2x96xf32>
    %c0_18 = arith.constant 0 : index
    %c0_19 = arith.constant 0 : index
    %c0_20 = arith.constant 0 : index
    %45 = vector.load %arg11[%c0_18, %c0_19, %c0_20] : memref<8x2x96xf32, #tpu.memory_space<vmem>>, vector<8x2x96xf32>
    tpu.vector_store %arg11[%c0_18, %c0_19, %c0_20], %44 {strides = array<i32>} : memref<8x2x96xf32, #tpu.memory_space<vmem>>, vector<8x2x96xf32>,
    %46 = vector.extract_strided_slice %43 {offsets = [0, 0, 96], sizes = [8, 2, 96], strides = [1, 1, 1]} : vector<8x2x192xf32> to vector<8x2x96xf32>
    %c0_21 = arith.constant 0 : index
    %c0_22 = arith.constant 0 : index
    %c0_23 = arith.constant 0 : index
    %47 = vector.load %arg12[%c0_21, %c0_22, %c0_23] : memref<8x2x96xf32, #tpu.memory_space<vmem>>, vector<8x2x96xf32>
    tpu.vector_store %arg12[%c0_21, %c0_22, %c0_23], %46 {strides = array<i32>} : memref<8x2x96xf32, #tpu.memory_space<vmem>>, vector<8x2x96xf32>,
    %c0_24 = arith.constant 0 : index
    %c0_25 = arith.constant 0 : index
    %48 = vector.load %arg6[%c0_24, %c0_25] : memref<32x96xf32, #tpu.memory_space<vmem>>, vector<32x96xf32>
    %c0_26 = arith.constant 0 : index
    %c0_27 = arith.constant 0 : index
    %49 = vector.load %arg7[%c0_26, %c0_27] : memref<1x96xf32, #tpu.memory_space<vmem>>, vector<1x96xf32>
    %c0_28 = arith.constant 0 : index
    %c0_29 = arith.constant 0 : index
    %50 = vector.load %arg8[%c0_28, %c0_29] : memref<32x96xf32, #tpu.memory_space<vmem>>, vector<32x96xf32>
    %c0_30 = arith.constant 0 : index
    %c0_31 = arith.constant 0 : index
    %51 = vector.load %arg9[%c0_30, %c0_31] : memref<1x96xf32, #tpu.memory_space<vmem>>, vector<1x96xf32>
    %cst_32 = arith.constant 0.000000e+00 : f32
    %52 = vector.broadcast %cst_32 : f32 to vector<2x32xf32>
    %c0_i32 = arith.constant 0 : i32
    %c8_i32 = arith.constant 8 : i32
    %53 = arith.addi %c0_i32, %c8_i32 : i32
    %c1_i32 = arith.constant 1 : i32
    %54:2 = scf.for %arg13 = %c0_i32 to %53 step %c1_i32 iter_args(%arg14 = %52, %arg15 = %52) -> (vector<2x32xf32>, vector<2x32xf32>)  : i32 {
      %c7_i32 = arith.constant 7 : i32
      %55 = arith.subi %c7_i32, %arg13 : i32
      %56 = arith.index_cast %arg13 : i32 to index
      %c0_34 = arith.constant 0 : index
      %c0_35 = arith.constant 0 : index
      %57 = vector.load %arg11[%56, %c0_34, %c0_35] : memref<8x2x96xf32, #tpu.memory_space<vmem>>, vector<1x2x96xf32>
      %58 = vector.shape_cast %57 : vector<1x2x96xf32> to vector<2x96xf32>
      %cst_36 = arith.constant dense<0.000000e+00> : vector<2x96xf32>
      %59 = tpu.matmul %arg14, %48, %cst_36 {dimension_numbers = #tpu.dot_dimension_numbers<[1], [0], [0], [1], [0, 0, 1, 1], [], []>} : vector<2x32xf32>, vector<32x96xf32>, vector<2x96xf32> -> vector<2x96xf32>
      %60 = vector.broadcast %49 : vector<1x96xf32> to vector<2x96xf32>
      %61 = arith.addf %59, %60 : vector<2x96xf32>
      %62 = vector.extract_strided_slice %58 {offsets = [0, 0], sizes = [2, 32], strides = [1, 1]} : vector<2x96xf32> to vector<2x32xf32>
      %63 = vector.extract_strided_slice %61 {offsets = [0, 0], sizes = [2, 32], strides = [1, 1]} : vector<2x96xf32> to vector<2x32xf32>
      %64 = arith.addf %62, %63 : vector<2x32xf32>
      %65 = arith.negf %64 : vector<2x32xf32>
      %66 = math.exp %65 : vector<2x32xf32>
      %cst_37 = arith.constant 1.000000e+00 : f32
      %67 = vector.broadcast %cst_37 : f32 to vector<2x32xf32>
      %68 = arith.addf %67, %66 : vector<2x32xf32>
      %69 = arith.divf %67, %68 : vector<2x32xf32>
      %70 = vector.extract_strided_slice %58 {offsets = [0, 32], sizes = [2, 32], strides = [1, 1]} : vector<2x96xf32> to vector<2x32xf32>
      %71 = vector.extract_strided_slice %61 {offsets = [0, 32], sizes = [2, 32], strides = [1, 1]} : vector<2x96xf32> to vector<2x32xf32>
      %72 = arith.addf %70, %71 : vector<2x32xf32>
      %73 = arith.negf %72 : vector<2x32xf32>
      %74 = math.exp %73 : vector<2x32xf32>
      %cst_38 = arith.constant 1.000000e+00 : f32
      %75 = vector.broadcast %cst_38 : f32 to vector<2x32xf32>
      %76 = arith.addf %75, %74 : vector<2x32xf32>
      %77 = arith.divf %75, %76 : vector<2x32xf32>
      %78 = vector.extract_strided_slice %58 {offsets = [0, 64], sizes = [2, 32], strides = [1, 1]} : vector<2x96xf32> to vector<2x32xf32>
      %79 = vector.extract_strided_slice %61 {offsets = [0, 64], sizes = [2, 32], strides = [1, 1]} : vector<2x96xf32> to vector<2x32xf32>
      %80 = arith.mulf %69, %79 : vector<2x32xf32>
      %81 = arith.addf %78, %80 : vector<2x32xf32>
      %82 = math.tanh %81 : vector<2x32xf32>
      %cst_39 = arith.constant 1.000000e+00 : f32
      %83 = vector.broadcast %cst_39 : f32 to vector<2x32xf32>
      %84 = arith.subf %83, %77 : vector<2x32xf32>
      %85 = arith.mulf %84, %82 : vector<2x32xf32>
      %86 = arith.mulf %77, %arg14 : vector<2x32xf32>
      %87 = arith.addf %85, %86 : vector<2x32xf32>
      %88 = arith.index_cast %55 : i32 to index
      %c0_40 = arith.constant 0 : index
      %c0_41 = arith.constant 0 : index
      %89 = vector.load %arg12[%88, %c0_40, %c0_41] : memref<8x2x96xf32, #tpu.memory_space<vmem>>, vector<1x2x96xf32>
      %90 = vector.shape_cast %89 : vector<1x2x96xf32> to vector<2x96xf32>
      %cst_42 = arith.constant dense<0.000000e+00> : vector<2x96xf32>
      %91 = tpu.matmul %arg15, %50, %cst_42 {dimension_numbers = #tpu.dot_dimension_numbers<[1], [0], [0], [1], [0, 0, 1, 1], [], []>} : vector<2x32xf32>, vector<32x96xf32>, vector<2x96xf32> -> vector<2x96xf32>
      %92 = vector.broadcast %51 : vector<1x96xf32> to vector<2x96xf32>
      %93 = arith.addf %91, %92 : vector<2x96xf32>
      %94 = vector.extract_strided_slice %90 {offsets = [0, 0], sizes = [2, 32], strides = [1, 1]} : vector<2x96xf32> to vector<2x32xf32>
      %95 = vector.extract_strided_slice %93 {offsets = [0, 0], sizes = [2, 32], strides = [1, 1]} : vector<2x96xf32> to vector<2x32xf32>
      %96 = arith.addf %94, %95 : vector<2x32xf32>
      %97 = arith.negf %96 : vector<2x32xf32>
      %98 = math.exp %97 : vector<2x32xf32>
      %cst_43 = arith.constant 1.000000e+00 : f32
      %99 = vector.broadcast %cst_43 : f32 to vector<2x32xf32>
      %100 = arith.addf %99, %98 : vector<2x32xf32>
      %101 = arith.divf %99, %100 : vector<2x32xf32>
      %102 = vector.extract_strided_slice %90 {offsets = [0, 32], sizes = [2, 32], strides = [1, 1]} : vector<2x96xf32> to vector<2x32xf32>
      %103 = vector.extract_strided_slice %93 {offsets = [0, 32], sizes = [2, 32], strides = [1, 1]} : vector<2x96xf32> to vector<2x32xf32>
      %104 = arith.addf %102, %103 : vector<2x32xf32>
      %105 = arith.negf %104 : vector<2x32xf32>
      %106 = math.exp %105 : vector<2x32xf32>
      %cst_44 = arith.constant 1.000000e+00 : f32
      %107 = vector.broadcast %cst_44 : f32 to vector<2x32xf32>
      %108 = arith.addf %107, %106 : vector<2x32xf32>
      %109 = arith.divf %107, %108 : vector<2x32xf32>
      %110 = vector.extract_strided_slice %90 {offsets = [0, 64], sizes = [2, 32], strides = [1, 1]} : vector<2x96xf32> to vector<2x32xf32>
      %111 = vector.extract_strided_slice %93 {offsets = [0, 64], sizes = [2, 32], strides = [1, 1]} : vector<2x96xf32> to vector<2x32xf32>
      %112 = arith.mulf %101, %111 : vector<2x32xf32>
      %113 = arith.addf %110, %112 : vector<2x32xf32>
      %114 = math.tanh %113 : vector<2x32xf32>
      %cst_45 = arith.constant 1.000000e+00 : f32
      %115 = vector.broadcast %cst_45 : f32 to vector<2x32xf32>
      %116 = arith.subf %115, %109 : vector<2x32xf32>
      %117 = arith.mulf %116, %114 : vector<2x32xf32>
      %118 = arith.mulf %109, %arg15 : vector<2x32xf32>
      %119 = arith.addf %117, %118 : vector<2x32xf32>
      %120 = arith.index_cast %arg13 : i32 to index
      %c0_46 = arith.constant 0 : index
      %c0_47 = arith.constant 0 : index
      %121 = vector.load %arg10[%120, %c0_46, %c0_47] : memref<8x2x64xf32, #tpu.memory_space<vmem>>, vector<1x2x32xf32>
      %122 = vector.shape_cast %121 : vector<1x2x32xf32> to vector<2x32xf32>
      %123 = vector.shape_cast %87 : vector<2x32xf32> to vector<1x2x32xf32>
      tpu.vector_store %arg10[%120, %c0_46, %c0_47], %123 {strides = array<i32>} : memref<8x2x64xf32, #tpu.memory_space<vmem>>, vector<1x2x32xf32>,
      %124 = arith.index_cast %55 : i32 to index
      %c0_48 = arith.constant 0 : index
      %c32 = arith.constant 32 : index
      %125 = vector.load %arg10[%124, %c0_48, %c32] : memref<8x2x64xf32, #tpu.memory_space<vmem>>, vector<1x2x32xf32>
      %126 = vector.shape_cast %125 : vector<1x2x32xf32> to vector<2x32xf32>
      %127 = vector.shape_cast %119 : vector<2x32xf32> to vector<1x2x32xf32>
      tpu.vector_store %arg10[%124, %c0_48, %c32], %127 {strides = array<i32>} : memref<8x2x64xf32, #tpu.memory_space<vmem>>, vector<1x2x32xf32>,
      scf.yield %87, %119 : vector<2x32xf32>, vector<2x32xf32>
    }
    %c8_i32_33 = arith.constant 8 : i32
    return
  }
  func.func @transform_0(%arg0: i32) -> (i32, i32, i32) {
    %c0_i32 = arith.constant 0 : i32
    %c0_i32_0 = arith.constant 0 : i32
    %c0_i32_1 = arith.constant 0 : i32
    return %c0_i32, %arg0, %c0_i32_0 : i32, i32, i32
  }
  func.func @transform_1(%arg0: i32) -> (i32, i32) {
    %c0_i32 = arith.constant 0 : i32
    %c0_i32_0 = arith.constant 0 : i32
    %c0_i32_1 = arith.constant 0 : i32
    return %c0_i32, %c0_i32_0 : i32, i32
  }
  func.func @transform_2(%arg0: i32) -> (i32, i32) {
    %c0_i32 = arith.constant 0 : i32
    %c0_i32_0 = arith.constant 0 : i32
    %c0_i32_1 = arith.constant 0 : i32
    return %c0_i32, %c0_i32_0 : i32, i32
  }
  func.func @transform_3(%arg0: i32) -> (i32, i32) {
    %c0_i32 = arith.constant 0 : i32
    %c0_i32_0 = arith.constant 0 : i32
    %c0_i32_1 = arith.constant 0 : i32
    return %c0_i32, %c0_i32_0 : i32, i32
  }
  func.func @transform_4(%arg0: i32) -> (i32, i32) {
    %c0_i32 = arith.constant 0 : i32
    %c0_i32_0 = arith.constant 0 : i32
    %c0_i32_1 = arith.constant 0 : i32
    return %c0_i32, %c0_i32_0 : i32, i32
  }
  func.func @transform_5(%arg0: i32) -> (i32, i32) {
    %c0_i32 = arith.constant 0 : i32
    %c0_i32_0 = arith.constant 0 : i32
    %c0_i32_1 = arith.constant 0 : i32
    return %c0_i32, %c0_i32_0 : i32, i32
  }
  func.func @transform_6(%arg0: i32) -> (i32, i32) {
    %c0_i32 = arith.constant 0 : i32
    %c0_i32_0 = arith.constant 0 : i32
    %c0_i32_1 = arith.constant 0 : i32
    return %c0_i32, %c0_i32_0 : i32, i32
  }
  func.func @transform_7(%arg0: i32) -> (i32, i32) {
    %c0_i32 = arith.constant 0 : i32
    %c0_i32_0 = arith.constant 0 : i32
    %c0_i32_1 = arith.constant 0 : i32
    return %c0_i32, %c0_i32_0 : i32, i32
  }
  func.func @transform_8(%arg0: i32) -> (i32, i32) {
    %c0_i32 = arith.constant 0 : i32
    %c0_i32_0 = arith.constant 0 : i32
    %c0_i32_1 = arith.constant 0 : i32
    return %c0_i32, %c0_i32_0 : i32, i32
  }
  func.func @transform_9(%arg0: i32) -> (i32, i32, i32) {
    %c0_i32 = arith.constant 0 : i32
    %c0_i32_0 = arith.constant 0 : i32
    %c0_i32_1 = arith.constant 0 : i32
    return %c0_i32, %arg0, %c0_i32_0 : i32, i32, i32
  }
}

</mosaic_0001>

<llo_original>
// kernel: tpu_custom_call.1
$region0: #{tpu_custom_call.1}
  #allocation0 [shape = 'u32[]', space=smem, size = 0x4, offset = 0x4, fixed_abs, tag = 'smem constant byte address 0x4 - core index']
  #allocation1 [shape = 'u32[144,128]{1,0:T(1,128)}', space=vmem, size = 0x12000, scoped, tag = 'internal scratch']
  #allocation2 [shape = 'f32[8,2,96]{2,1,0:T(2,128)}', space=vmem, size = 0x2000, scoped, tag = 'scratch operand']
  #allocation3 [shape = 'f32[8,2,96]{2,1,0:T(2,128)}', space=vmem, size = 0x2000, scoped, tag = 'scratch operand']
  %s0 = inlined_call_operand.hbm [shape: f32[8,2,32], index: 0, kind: input, shape index: {}]
  %s1 = inlined_call_operand.vmem [shape: f32[1,32], index: 1, kind: input, shape index: {}]
  %s2 = inlined_call_operand.vmem [shape: f32[1,32], index: 2, kind: input, shape index: {}]
  %s3 = inlined_call_operand.hbm [shape: f32[32,192], index: 3, kind: input, shape index: {}]
  %s4 = inlined_call_operand.vmem [shape: f32[1,192], index: 4, kind: input, shape index: {}]
  %s5 = inlined_call_operand.hbm [shape: f32[32,96], index: 5, kind: input, shape index: {}]
  %s6 = inlined_call_operand.vmem [shape: f32[1,96], index: 6, kind: input, shape index: {}]
  %s7 = inlined_call_operand.hbm [shape: f32[32,96], index: 7, kind: input, shape index: {}]
  %s8 = inlined_call_operand.vmem [shape: f32[1,96], index: 8, kind: input, shape index: {}]
  %s9 = inlined_call_operand.hbm [shape: f32[8,2,64], index: 9, kind: output, shape index: {}]
  %s10 = sld [smem:[#allocation0]]
  $region69: #{tpu_custom_call.1} parent=0
    _
  %s12 = ssub.s32 1, %s10
  %s13 = scalar_select 0, %s12, %s10
  $region1: #{tpu_custom_call.1} parent=0
    #allocation4 [shape = 'u8[8192]{0}', space=vmem, size = 0x2000, scoped, tag = 'input window, operand 0, single buffered']
    #allocation5 [shape = 's32[1]{0}', space=sflag, size = 0x4, scoped, tag = 'scoped memory for tpu_custom_call.1']
    #allocation6 [shape = 's32[1]{0}', space=sflag, size = 0x4, scoped, tag = 'scoped memory for tpu_custom_call.1']
    #allocation7 [shape = 'u8[32768]{0}', space=vmem, size = 0x8000, scoped, tag = 'input window, operand 3, single buffered']
    #allocation8 [shape = 's32[1]{0}', space=sflag, size = 0x4, scoped, tag = 'scoped memory for tpu_custom_call.1']
    #allocation9 [shape = 'u8[16384]{0}', space=vmem, size = 0x4000, scoped, tag = 'input window, operand 5, single buffered']
    #allocation10 [shape = 'u8[16384]{0}', space=vmem, size = 0x4000, scoped, tag = 'input window, operand 7, single buffered']
    #allocation11 [shape = 's32[1]{0}', space=sflag, size = 0x4, scoped, tag = 'scoped memory for tpu_custom_call.1']
    #allocation12 [shape = 'u8[8192]{0}', space=vmem, size = 0x2000, scoped, tag = 'output window, operand 0, single buffered']
    %14 = vsyncpa [#allocation5], 0
    %15 = vsyncpa [#allocation8], 0
    %16 = vsyncpa [#allocation11], 0
    %17 = vsyncpa [#allocation6], 0
    // Predicated region
    $region2: #{tpu_custom_call.1} parent=1 // pred_check
      _
    $region3: #{tpu_custom_call.1} parent=1 // pred_check_branch
      %19 = sbr.rel (0) target = $region5
    $region4: #{tpu_custom_call.1} parent=1 // pred_region
      %s21 = ssub.s32 256, 256
      %22 = vsyncadd [#allocation5], %s21
      %s23 = sshll.u32 [#allocation4], 4
      %s24 = int_to_ptr.vmem [resolvable:$true] %s23
      %29 = dma.hbm_to_vmem [thread:$0]  %s0, 256, %s24, [#allocation5], 32, 32, 2
    $region5: #{tpu_custom_call.1} parent=1 // pred_fallthru
      _
    // Predicated region
    $region6: #{tpu_custom_call.1} parent=1 // pred_check
      _
    $region7: #{tpu_custom_call.1} parent=1 // pred_check_branch
      %31 = sbr.rel (0) target = $region9
    $region8: #{tpu_custom_call.1} parent=1 // pred_region
      _
    $region9: #{tpu_custom_call.1} parent=1 // pred_fallthru
      _
    // Predicated region
    $region10: #{tpu_custom_call.1} parent=1 // pred_check
      _
    $region11: #{tpu_custom_call.1} parent=1 // pred_check_branch
      %33 = sbr.rel (0) target = $region13
    $region12: #{tpu_custom_call.1} parent=1 // pred_region
      _
    $region13: #{tpu_custom_call.1} parent=1 // pred_fallthru
      _
    // Predicated region
    $region14: #{tpu_custom_call.1} parent=1 // pred_check
      _
    $region15: #{tpu_custom_call.1} parent=1 // pred_check_branch
      %35 = sbr.rel (0) target = $region17
    $region16: #{tpu_custom_call.1} parent=1 // pred_region
      %s37 = ssub.s32 1024, 1024
      %38 = vsyncadd [#allocation8], %s37
      %s39 = sshll.u32 [#allocation7], 4
      %s40 = int_to_ptr.vmem [resolvable:$true] %s39
      %45 = dma.hbm_to_vmem [thread:$0]  %s3, 1024, %s40, [#allocation8], 256, 256, 16
    $region17: #{tpu_custom_call.1} parent=1 // pred_fallthru
      _
    // Predicated region
    $region18: #{tpu_custom_call.1} parent=1 // pred_check
      _
    $region19: #{tpu_custom_call.1} parent=1 // pred_check_branch
      %47 = sbr.rel (0) target = $region21
    $region20: #{tpu_custom_call.1} parent=1 // pred_region
      _
    $region21: #{tpu_custom_call.1} parent=1 // pred_fallthru
      _
    // Predicated region
    $region22: #{tpu_custom_call.1} parent=1 // pred_check
      _
    $region23: #{tpu_custom_call.1} parent=1 // pred_check_branch
      %49 = sbr.rel (0) target = $region25
    $region24: #{tpu_custom_call.1} parent=1 // pred_region
      %s51 = ssub.s32 512, 512
      %52 = vsyncadd [#allocation8], %s51
      %s53 = sshll.u32 [#allocation9], 4
      %s54 = int_to_ptr.vmem [resolvable:$true] %s53
      %59 = dma.hbm_to_vmem [thread:$0]  %s5, 512, %s54, [#allocation8], 128, 128, 8
    $region25: #{tpu_custom_call.1} parent=1 // pred_fallthru
      _
    // Predicated region
    $region26: #{tpu_custom_call.1} parent=1 // pred_check
      _
    $region27: #{tpu_custom_call.1} parent=1 // pred_check_branch
      %61 = sbr.rel (0) target = $region29
    $region28: #{tpu_custom_call.1} parent=1 // pred_region
      _
    $region29: #{tpu_custom_call.1} parent=1 // pred_fallthru
      _
    // Predicated region
    $region30: #{tpu_custom_call.1} parent=1 // pred_check
      _
    $region31: #{tpu_custom_call.1} parent=1 // pred_check_branch
      %63 = sbr.rel (0) target = $region33
    $region32: #{tpu_custom_call.1} parent=1 // pred_region
      %s65 = ssub.s32 512, 512
      %66 = vsyncadd [#allocation11], %s65
      %s67 = sshll.u32 [#allocation10], 4
      %s68 = int_to_ptr.vmem [resolvable:$true] %s67
      %73 = dma.hbm_to_vmem [thread:$0]  %s7, 512, %s68, [#allocation11], 128, 128, 8
    $region33: #{tpu_custom_call.1} parent=1 // pred_fallthru
      _
    // Predicated region
    $region34: #{tpu_custom_call.1} parent=1 // pred_check
      _
    $region35: #{tpu_custom_call.1} parent=1 // pred_check_branch
      %75 = sbr.rel (0) target = $region37
    $region36: #{tpu_custom_call.1} parent=1 // pred_region
      _
    $region37: #{tpu_custom_call.1} parent=1 // pred_fallthru
      _
    // Predicated region
    $region38: #{tpu_custom_call.1} parent=1 // pred_check
      _
    $region39: #{tpu_custom_call.1} parent=1 // pred_check_branch
      %77 = sbr.rel (0) target = $region41
    $region40: #{tpu_custom_call.1} parent=1 // pred_region
      %78 = dma.done [#allocation5], 256
    $region41: #{tpu_custom_call.1} parent=1 // pred_fallthru
      _
    // Predicated region
    $region42: #{tpu_custom_call.1} parent=1 // pred_check
      _
    $region43: #{tpu_custom_call.1} parent=1 // pred_check_branch
      %80 = sbr.rel (0) target = $region45
    $region44: #{tpu_custom_call.1} parent=1 // pred_region
      %81 = dma.done [#allocation8], 1024
    $region45: #{tpu_custom_call.1} parent=1 // pred_fallthru
      _
    // Predicated region
    $region46: #{tpu_custom_call.1} parent=1 // pred_check
      _
    $region47: #{tpu_custom_call.1} parent=1 // pred_check_branch
      %83 = sbr.rel (0) target = $region49
    $region48: #{tpu_custom_call.1} parent=1 // pred_region
      %84 = dma.done [#allocation8], 512
    $region49: #{tpu_custom_call.1} parent=1 // pred_fallthru
      _
    // Predicated region
    $region50: #{tpu_custom_call.1} parent=1 // pred_check
      _
    $region51: #{tpu_custom_call.1} parent=1 // pred_check_branch
      %86 = sbr.rel (0) target = $region53
    $region52: #{tpu_custom_call.1} parent=1 // pred_region
      %87 = dma.done [#allocation11], 512
    $region53: #{tpu_custom_call.1} parent=1 // pred_fallthru
      _
    %v88 = vld [vmem:[#allocation4] sm:$0x3]
    %v89 = vld [vmem:[#allocation4 + $0x2] sm:$0x3]
    %v90 = vld [vmem:[#allocation4 + $0x4] sm:$0x3]
    %v91 = vld [vmem:[#allocation4 + $0x6] sm:$0x3]
    %v92 = vld [vmem:[#allocation4 + $0x8] sm:$0x3]
    %v93 = vld [vmem:[#allocation4 + $0xa] sm:$0x3]
    %v94 = vld [vmem:[#allocation4 + $0xc] sm:$0x3]
    %v95 = vld [vmem:[#allocation4 + $0xe] sm:$0x3]
    %vm96 = vcmask 254976
    %v97 = vsel %vm96, %v88, 0.0
    %98 = vadd.xlane.f32.xlu0 %v97
    %v99 = vpop.xlane.xlu0 %98
    %v100 = vsel %vm96, %v89, 0.0
    %101 = vadd.xlane.f32.xlu0 %v100
    %v102 = vpop.xlane.xlu0 %101
    %v103 = vsel %vm96, %v90, 0.0
    %104 = vadd.xlane.f32.xlu0 %v103
    %v105 = vpop.xlane.xlu0 %104
    %v106 = vsel %vm96, %v91, 0.0
    %107 = vadd.xlane.f32.xlu0 %v106
    %v108 = vpop.xlane.xlu0 %107
    %v109 = vsel %vm96, %v92, 0.0
    %110 = vadd.xlane.f32.xlu0 %v109
    %v111 = vpop.xlane.xlu0 %110
    %v112 = vsel %vm96, %v93, 0.0
    %113 = vadd.xlane.f32.xlu0 %v112
    %v114 = vpop.xlane.xlu0 %113
    %v115 = vsel %vm96, %v94, 0.0
    %116 = vadd.xlane.f32.xlu0 %v115
    %v117 = vpop.xlane.xlu0 %116
    %v118 = vsel %vm96, %v95, 0.0
    %119 = vadd.xlane.f32.xlu0 %v118
    %v120 = vpop.xlane.xlu0 %119
    %v121 = vrcp.pop 32.0
    %v122 = vmul.f32 %v99, %v121
    %v123 = vmul.f32 %v102, %v121
    %v124 = vmul.f32 %v105, %v121
    %v125 = vmul.f32 %v108, %v121
    %v126 = vmul.f32 %v111, %v121
    %v127 = vmul.f32 %v114, %v121
    %v128 = vmul.f32 %v117, %v121
    %v129 = vmul.f32 %v120, %v121
    %v130 = vsub.f32 %v88, %v122
    %v131 = vsub.f32 %v89, %v123
    %v132 = vsub.f32 %v90, %v124
    %v133 = vsub.f32 %v91, %v125
    %v134 = vsub.f32 %v92, %v126
    %v135 = vsub.f32 %v93, %v127
    %v136 = vsub.f32 %v94, %v128
    %v137 = vsub.f32 %v95, %v129
    %v138 = vmul.f32 %v130, %v130
    %v139 = vmul.f32 %v131, %v131
    %v140 = vmul.f32 %v132, %v132
    %v141 = vmul.f32 %v133, %v133
    %v142 = vmul.f32 %v134, %v134
    %v143 = vmul.f32 %v135, %v135
    %v144 = vmul.f32 %v136, %v136
    %v145 = vmul.f32 %v137, %v137
    %v146 = vsel %vm96, %v138, 0.0
    %147 = vadd.xlane.f32.xlu0 %v146
    %v148 = vpop.xlane.xlu0 %147
    %v149 = vsel %vm96, %v139, 0.0
    %150 = vadd.xlane.f32.xlu0 %v149
    %v151 = vpop.xlane.xlu0 %150
    %v152 = vsel %vm96, %v140, 0.0
    %153 = vadd.xlane.f32.xlu0 %v152
    %v154 = vpop.xlane.xlu0 %153
    %v155 = vsel %vm96, %v141, 0.0
    %156 = vadd.xlane.f32.xlu0 %v155
    %v157 = vpop.xlane.xlu0 %156
    %v158 = vsel %vm96, %v142, 0.0
    %159 = vadd.xlane.f32.xlu0 %v158
    %v160 = vpop.xlane.xlu0 %159
    %v161 = vsel %vm96, %v143, 0.0
    %162 = vadd.xlane.f32.xlu0 %v161
    %v163 = vpop.xlane.xlu0 %162
    %v164 = vsel %vm96, %v144, 0.0
    %165 = vadd.xlane.f32.xlu0 %v164
    %v166 = vpop.xlane.xlu0 %165
    %v167 = vsel %vm96, %v145, 0.0
    %168 = vadd.xlane.f32.xlu0 %v167
    %v169 = vpop.xlane.xlu0 %168
    %v170 = vmul.f32 %v148, %v121
    %v171 = vmul.f32 %v151, %v121
    %v172 = vmul.f32 %v154, %v121
    %v173 = vmul.f32 %v157, %v121
    %v174 = vmul.f32 %v160, %v121
    %v175 = vmul.f32 %v163, %v121
    %v176 = vmul.f32 %v166, %v121
    %v177 = vmul.f32 %v169, %v121
    %v178 = vadd.f32 %v170, 1e-05
    %v179 = vadd.f32 %v171, 1e-05
    %v180 = vadd.f32 %v172, 1e-05
    %v181 = vadd.f32 %v173, 1e-05
    %v182 = vadd.f32 %v174, 1e-05
    %v183 = vadd.f32 %v175, 1e-05
    %v184 = vadd.f32 %v176, 1e-05
    %v185 = vadd.f32 %v177, 1e-05
    %v186 = vrsqrt.pop %v178
    %v187 = vrsqrt.pop %v179
    %v188 = vrsqrt.pop %v180
    %v189 = vrsqrt.pop %v181
    %v190 = vrsqrt.pop %v182
    %v191 = vrsqrt.pop %v183
    %v192 = vrsqrt.pop %v184
    %v193 = vrsqrt.pop %v185
    %v194 = vmul.f32 %v130, %v186
    %v195 = vmul.f32 %v131, %v187
    %v196 = vmul.f32 %v132, %v188
    %v197 = vmul.f32 %v133, %v189
    %v198 = vmul.f32 %v134, %v190
    %v199 = vmul.f32 %v135, %v191
    %v200 = vmul.f32 %v136, %v192
    %v201 = vmul.f32 %v137, %v193
    %v202 = vld [vmem:[%s1] sm:$0x1]
    %v204 = vlaneseq
    %v205 = vshrl.u32 %v204, 7
    %v206 = vsub.s32 0, %v205
    %v207 = vrot.slane %v202, %v206
    %v209 = vmul.f32 %v194, %v207
    %v210 = vmul.f32 %v195, %v207
    %v211 = vmul.f32 %v196, %v207
    %v212 = vmul.f32 %v197, %v207
    %v213 = vmul.f32 %v198, %v207
    %v214 = vmul.f32 %v199, %v207
    %v215 = vmul.f32 %v200, %v207
    %v216 = vmul.f32 %v201, %v207
    %v217 = vld [vmem:[%s2] sm:$0x1]
    %v219 = vlaneseq
    %v220 = vshrl.u32 %v219, 7
    %v221 = vsub.s32 0, %v220
    %v222 = vrot.slane %v217, %v221
    %v224 = vadd.f32 %v209, %v222
    %v225 = vadd.f32 %v210, %v222
    %v226 = vadd.f32 %v211, %v222
    %v227 = vadd.f32 %v212, %v222
    %v228 = vadd.f32 %v213, %v222
    %v229 = vadd.f32 %v214, %v222
    %v230 = vadd.f32 %v215, %v222
    %v231 = vadd.f32 %v216, %v222
    %v232 = vmul.f32 %v224, 0.5
    %v233 = vmul.f32 %v225, 0.5
    %v234 = vmul.f32 %v226, 0.5
    %v235 = vmul.f32 %v227, 0.5
    %v236 = vmul.f32 %v228, 0.5
    %v237 = vmul.f32 %v229, 0.5
    %v238 = vmul.f32 %v230, 0.5
    %v239 = vmul.f32 %v231, 0.5
    %v240 = vmul.f32 %v224, 0.70710677
    %v241 = vmul.f32 %v225, 0.70710677
    %v242 = vmul.f32 %v226, 0.70710677
    %v243 = vmul.f32 %v227, 0.70710677
    %v244 = vmul.f32 %v228, 0.70710677
    %v245 = vmul.f32 %v229, 0.70710677
    %v246 = vmul.f32 %v230, 0.70710677
    %v247 = vmul.f32 %v231, 0.70710677
    %v248 = verf.f32.pop %v240
    %v249 = verf.f32.pop %v241
    %v250 = verf.f32.pop %v242
    %v251 = verf.f32.pop %v243
    %v252 = verf.f32.pop %v244
    %v253 = verf.f32.pop %v245
    %v254 = verf.f32.pop %v246
    %v255 = verf.f32.pop %v247
    %v256 = vadd.f32 %v248, 1.0
    %v257 = vadd.f32 %v249, 1.0
    %v258 = vadd.f32 %v250, 1.0
    %v259 = vadd.f32 %v251, 1.0
    %v260 = vadd.f32 %v252, 1.0
    %v261 = vadd.f32 %v253, 1.0
    %v262 = vadd.f32 %v254, 1.0
    %v263 = vadd.f32 %v255, 1.0
    %v264 = vmul.f32 %v232, %v256
    %v265 = vmul.f32 %v233, %v257
    %v266 = vmul.f32 %v234, %v258
    %v267 = vmul.f32 %v235, %v259
    %v268 = vmul.f32 %v236, %v260
    %v269 = vmul.f32 %v237, %v261
    %v270 = vmul.f32 %v238, %v262
    %v271 = vmul.f32 %v239, %v263
    %v272 = vld [vmem:[#allocation7] sm:$0xff]
    %v273 = vld [vmem:[#allocation7 + $0x8] sm:$0xff]
    %v274 = vld [vmem:[#allocation7 + $0x10] sm:$0xff]
    %v275 = vld [vmem:[#allocation7 + $0x18] sm:$0xff]
    %v276 = vld [vmem:[#allocation7 + $0x20] sm:$0xff]
    %v277 = vld [vmem:[#allocation7 + $0x28] sm:$0xff]
    %v278 = vld [vmem:[#allocation7 + $0x30] sm:$0xff]
    %v279 = vld [vmem:[#allocation7 + $0x38] sm:$0xff]
    %v280 = vld [vmem:[%s4] sm:$0x3]
    %v282 = vlaneseq
    %v283 = vshrl.u32 %v282, 7
    %v284 = vsub.s32 0, %v283
    %v285 = vrot.slane %v280, %v284
    %v286 = vlaneseq
    %v287 = vshrl.u32 %v286, 7
    %v288 = vsub.s32 1, %v287
    %v289 = vrot.slane %v280, %v288
    %v300 = vcombine.low %v264, %v265
    %v301 = vcombine.low %v266, %v267
    %v303 = vunpack.c.l.s4 1983009808
    %v304 = vunpack.c.0.s8 %v303
    %v305 = vlaneseq
    %v306 = vshrl.u32 %v305, 7
    %v307 = vsub.s32 %v304, %v306
    %v308 = vrot.slane %v300, %v307
    %v310 = vunpack.c.l.s4 1983009808
    %v311 = vunpack.c.0.s8 %v310
    %v312 = vlaneseq
    %v313 = vshrl.u32 %v312, 7
    %v314 = vsub.s32 %v311, %v313
    %v315 = vrot.slane %v301, %v314
    %v316 = vcombine.low %v308, %v315
    %v317 = vcombine.low %v268, %v269
    %v318 = vcombine.low %v270, %v271
    %v320 = vunpack.c.l.s4 1983009808
    %v321 = vunpack.c.0.s8 %v320
    %v322 = vlaneseq
    %v323 = vshrl.u32 %v322, 7
    %v324 = vsub.s32 %v321, %v323
    %v325 = vrot.slane %v317, %v324
    %v327 = vunpack.c.l.s4 1983009808
    %v328 = vunpack.c.0.s8 %v327
    %v329 = vlaneseq
    %v330 = vshrl.u32 %v329, 7
    %v331 = vsub.s32 %v328, %v330
    %v332 = vrot.slane %v318, %v331
    %v333 = vcombine.low %v325, %v332
    %vm334 = vcmask 261120
    %v335 = vsel %vm334, %v316, 0
    %v337 = vsel %vm334, %v333, 0
    %339 = vmatprep.subr.mxu0 %v273
    %340 = vmatpush1.msra.mxu0 %v272
    %341 = vmatprep.subr.mxu0 %v275
    %342 = vmatpush1.msra.mxu0 %v274
    %343 = vmatprep.subr.mxu0 %v277
    %344 = vmatpush1.msra.mxu0 %v276
    %345 = vmatprep.subr.mxu0 %v279
    %346 = vmatpush1.msra.mxu0 %v278
    %347 = vmatprep.subr.mxu0 0.0
    %348 = vmatpush1.msra.mxu0 0.0
    %349 = vmatprep.subr.mxu0 0.0
    %350 = vmatpush1.msra.mxu0 0.0
    %351 = vmatprep.subr.mxu0 0.0
    %352 = vmatpush1.msra.mxu0 0.0
    %353 = vmatprep.subr.mxu0 0.0
    %354 = vmatpush1.msra.mxu0 0.0
    %355 = vmatprep.subr.mxu0 0.0
    %356 = vmatpush1.msra.mxu0 0.0
    %357 = vmatprep.subr.mxu0 0.0
    %358 = vmatpush1.msra.mxu0 0.0
    %359 = vmatprep.subr.mxu0 0.0
    %360 = vmatpush1.msra.mxu0 0.0
    %361 = vmatprep.subr.mxu0 0.0
    %362 = vmatpush1.msra.mxu0 0.0
    %363 = vmatprep.subr.mxu0 0.0
    %364 = vmatpush1.msra.mxu0 0.0
    %365 = vmatprep.subr.mxu0 0.0
    %366 = vmatpush1.msra.mxu0 0.0
    %367 = vmatprep.subr.mxu0 0.0
    %368 = vmatpush1.msra.mxu0 0.0
    %369 = vmatprep.subr.mxu0 0.0
    %370 = vmatpush1.msra.mxu0 0.0
    %371 = vmatprep.subr.mxu0 0.0
    %372 = vmatpush1.msra.mxu0 0.0
    %373 = vmatprep.subr.mxu0 0.0
    %374 = vmatpush1.msra.mxu0 0.0
    %375 = vmatprep.subr.mxu0 0.0
    %376 = vmatpush1.msra.mxu0 0.0
    %377 = vmatprep.subr.mxu0 0.0
    %378 = vmatpush1.msra.mxu0 0.0
    %379 = vmatprep.subr.mxu0 0.0
    %380 = vmatpush1.msra.mxu0 0.0
    %381 = vmatprep.subr.mxu0 0.0
    %382 = vmatpush1.msra.mxu0 0.0
    %383 = vmatprep.subr.mxu0 0.0
    %384 = vmatpush1.msra.mxu0 0.0
    %385 = vmatprep.subr.mxu0 0.0
    %386 = vmatpush1.msra.mxu0 0.0
    %387 = vmatprep.subr.mxu0 0.0
    %388 = vmatpush1.msra.mxu0 0.0
    %389 = vmatprep.subr.mxu0 0.0
    %390 = vmatpush1.msra.mxu0 0.0
    %391 = vmatprep.subr.mxu0 0.0
    %392 = vmatpush1.msra.mxu0 0.0
    %393 = vmatprep.subr.mxu0 0.0
    %394 = vmatpush1.msra.mxu0 0.0
    %395 = vmatprep.subr.mxu0 0.0
    %396 = vmatpush1.msra.mxu0 0.0
    %397 = vmatprep.subr.mxu0 0.0
    %398 = vmatpush1.msra.mxu0 0.0
    %399 = vmatprep.subr.mxu0 0.0
    %400 = vmatpush1.msra.mxu0 0.0
    %401 = vmatprep.subr.mxu0 0.0
    %402 = vmatpush1.msra.mxu0 0.0
    %403 = vmatprep.mubr.f32.mxu0 0.0
    %404 = vmatmul.mubr.f32.gmra.mrb[0].mxu0 %v335
    %v405 = vpop.f32.mrb[0].mxu0
    %v406 = vadd.f32 %v285, %v405
    %v407 = vpop.f32.mrb[0].mxu0
    %v408 = vadd.f32 %v289, %v407
    %409 = vmatprep.mubr.f32.mxu0 0.0
    %410 = vmatmul.mubr.f32.gmra.mrb[0].mxu0 %v337
    %v411 = vpop.f32.mrb[0].mxu0
    %v412 = vadd.f32 %v285, %v411
    %v413 = vpop.f32.mrb[0].mxu0
    %v414 = vadd.f32 %v289, %v413
    %415 = vdwg.mxu0
    %v420 = vcombine.low %v406, %v408
    %v421 = vcombine.high %v406, %v408
    %v423 = vunpack.c.l.s4 1983009808
    %v424 = vunpack.c.0.s8 %v423
    %v425 = vlaneseq
    %v426 = vshrl.u32 %v425, 7
    %v427 = vsub.s32 %v424, %v426
    %v428 = vrot.slane %v420, %v427
    %v430 = vunpack.c.l.s4 1983009808
    %v431 = vunpack.c.0.s8 %v430
    %v432 = vlaneseq
    %v433 = vshrl.u32 %v432, 7
    %v434 = vsub.s32 %v431, %v433
    %v435 = vrot.slane %v421, %v434
    %v436 = vcombine.high %v428, %v428
    %v437 = vcombine.high %v435, %v435
    %v438 = vcombine.low %v412, %v414
    %v439 = vcombine.high %v412, %v414
    %v441 = vunpack.c.l.s4 1983009808
    %v442 = vunpack.c.0.s8 %v441
    %v443 = vlaneseq
    %v444 = vshrl.u32 %v443, 7
    %v445 = vsub.s32 %v442, %v444
    %v446 = vrot.slane %v438, %v445
    %v448 = vunpack.c.l.s4 1983009808
    %v449 = vunpack.c.0.s8 %v448
    %v450 = vlaneseq
    %v451 = vshrl.u32 %v450, 7
    %v452 = vsub.s32 %v449, %v451
    %v453 = vrot.slane %v439, %v452
    %v454 = vcombine.high %v446, %v446
    %v455 = vcombine.high %v453, %v453
    %vm464 = vcmask 779264
    %465 = vst.msk [vmem:[#allocation2] sm:$0x3] %vm464, %v428
    %466 = vst.msk [vmem:[#allocation2 + $0x2] sm:$0x3] %vm464, %v436
    %467 = vst.msk [vmem:[#allocation2 + $0x4] sm:$0x3] %vm464, %v435
    %468 = vst.msk [vmem:[#allocation2 + $0x6] sm:$0x3] %vm464, %v437
    %469 = vst.msk [vmem:[#allocation2 + $0x8] sm:$0x3] %vm464, %v446
    %470 = vst.msk [vmem:[#allocation2 + $0xa] sm:$0x3] %vm464, %v454
    %471 = vst.msk [vmem:[#allocation2 + $0xc] sm:$0x3] %vm464, %v453
    %472 = vst.msk [vmem:[#allocation2 + $0xe] sm:$0x3] %vm464, %v455
    %v474 = vunpack.c.l.s4 1983009808
    %v475 = vunpack.c.0.s8 %v474
    %v476 = vlaneseq
    %v477 = vshrl.u32 %v476, 7
    %v478 = vsub.s32 %v475, %v477
    %v479 = vrot.slane %v428, %v478
    %v480 = vcombine.high %v479, %v479
    %v482 = vunpack.c.l.s4 1983009808
    %v483 = vunpack.c.0.s8 %v482
    %v484 = vlaneseq
    %v485 = vshrl.u32 %v484, 7
    %v486 = vsub.s32 %v483, %v485
    %v487 = vrot.slane %v436, %v486
    %v488 = vcombine.high %v487, %v487
    %v490 = vunpack.c.l.s4 1983009808
    %v491 = vunpack.c.0.s8 %v490
    %v492 = vlaneseq
    %v493 = vshrl.u32 %v492, 7
    %v494 = vsub.s32 %v491, %v493
    %v495 = vrot.slane %v435, %v494
    %v496 = vcombine.high %v495, %v495
    %v498 = vunpack.c.l.s4 1983009808
    %v499 = vunpack.c.0.s8 %v498
    %v500 = vlaneseq
    %v501 = vshrl.u32 %v500, 7
    %v502 = vsub.s32 %v499, %v501
    %v503 = vrot.slane %v437, %v502
    %v504 = vcombine.high %v503, %v503
    %v506 = vunpack.c.l.s4 1983009808
    %v507 = vunpack.c.0.s8 %v506
    %v508 = vlaneseq
    %v509 = vshrl.u32 %v508, 7
    %v510 = vsub.s32 %v507, %v509
    %v511 = vrot.slane %v446, %v510
    %v512 = vcombine.high %v511, %v511
    %v514 = vunpack.c.l.s4 1983009808
    %v515 = vunpack.c.0.s8 %v514
    %v516 = vlaneseq
    %v517 = vshrl.u32 %v516, 7
    %v518 = vsub.s32 %v515, %v517
    %v519 = vrot.slane %v454, %v518
    %v520 = vcombine.high %v519, %v519
    %v522 = vunpack.c.l.s4 1983009808
    %v523 = vunpack.c.0.s8 %v522
    %v524 = vlaneseq
    %v525 = vshrl.u32 %v524, 7
    %v526 = vsub.s32 %v523, %v525
    %v527 = vrot.slane %v453, %v526
    %v528 = vcombine.high %v527, %v527
    %v530 = vunpack.c.l.s4 1983009808
    %v531 = vunpack.c.0.s8 %v530
    %v532 = vlaneseq
    %v533 = vshrl.u32 %v532, 7
    %v534 = vsub.s32 %v531, %v533
    %v535 = vrot.slane %v455, %v534
    %v536 = vcombine.high %v535, %v535
    %537 = vrot.lane.b32.xlu0 %v479, 32
    %v538 = vpop.permute.xlu0 %537
    %539 = vrot.lane.b32.xlu0 %v480, 32
    %v540 = vpop.permute.xlu0 %539
    %541 = vrot.lane.b32.xlu0 %v487, 32
    %v542 = vpop.permute.xlu0 %541
    %543 = vrot.lane.b32.xlu0 %v488, 32
    %v544 = vpop.permute.xlu0 %543
    %545 = vrot.lane.b32.xlu0 %v495, 32
    %v546 = vpop.permute.xlu0 %545
    %547 = vrot.lane.b32.xlu0 %v496, 32
    %v548 = vpop.permute.xlu0 %547
    %549 = vrot.lane.b32.xlu0 %v503, 32
    %v550 = vpop.permute.xlu0 %549
    %551 = vrot.lane.b32.xlu0 %v504, 32
    %v552 = vpop.permute.xlu0 %551
    %553 = vrot.lane.b32.xlu0 %v511, 32
    %v554 = vpop.permute.xlu0 %553
    %555 = vrot.lane.b32.xlu0 %v512, 32
    %v556 = vpop.permute.xlu0 %555
    %557 = vrot.lane.b32.xlu0 %v519, 32
    %v558 = vpop.permute.xlu0 %557
    %559 = vrot.lane.b32.xlu0 %v520, 32
    %v560 = vpop.permute.xlu0 %559
    %561 = vrot.lane.b32.xlu0 %v527, 32
    %v562 = vpop.permute.xlu0 %561
    %563 = vrot.lane.b32.xlu0 %v528, 32
    %v564 = vpop.permute.xlu0 %563
    %565 = vrot.lane.b32.xlu0 %v535, 32
    %v566 = vpop.permute.xlu0 %565
    %567 = vrot.lane.b32.xlu0 %v536, 32
    %v568 = vpop.permute.xlu0 %567
    %v569 = vsel %vm334, %v538, %v540
    %v570 = vsel %vm334, %v542, %v544
    %v571 = vsel %vm334, %v546, %v548
    %v572 = vsel %vm334, %v550, %v552
    %v573 = vsel %vm334, %v554, %v556
    %v574 = vsel %vm334, %v558, %v560
    %v575 = vsel %vm334, %v562, %v564
    %v576 = vsel %vm334, %v566, %v568
    %585 = vst.msk [vmem:[#allocation3] sm:$0x3] %vm464, %v569
    %586 = vst.msk [vmem:[#allocation3 + $0x2] sm:$0x3] %vm464, %v570
    %587 = vst.msk [vmem:[#allocation3 + $0x4] sm:$0x3] %vm464, %v571
    %588 = vst.msk [vmem:[#allocation3 + $0x6] sm:$0x3] %vm464, %v572
    %589 = vst.msk [vmem:[#allocation3 + $0x8] sm:$0x3] %vm464, %v573
    %590 = vst.msk [vmem:[#allocation3 + $0xa] sm:$0x3] %vm464, %v574
    %591 = vst.msk [vmem:[#allocation3 + $0xc] sm:$0x3] %vm464, %v575
    %592 = vst.msk [vmem:[#allocation3 + $0xe] sm:$0x3] %vm464, %v576
    %v593 = vld [vmem:[#allocation9] sm:$0xff]
    %v594 = vld [vmem:[#allocation9 + $0x8] sm:$0xff]
    %v595 = vld [vmem:[#allocation9 + $0x10] sm:$0xff]
    %v596 = vld [vmem:[#allocation9 + $0x18] sm:$0xff]
    %v597 = vld [vmem:[%s6] sm:$0x1]
    %v598 = vld [vmem:[#allocation10] sm:$0xff]
    %v599 = vld [vmem:[#allocation10 + $0x8] sm:$0xff]
    %v600 = vld [vmem:[#allocation10 + $0x10] sm:$0xff]
    %v601 = vld [vmem:[#allocation10 + $0x18] sm:$0xff]
    %v602 = vld [vmem:[%s8] sm:$0x1]
    loop: start=0, step=1, limit=8
    $region54: #{tpu_custom_call.1} parent=1 // loop_pre_header
      _
    $region55: #{tpu_custom_call.1} parent=1 // loop_header
      %s604 = sphi 0, %s608
      %p605 = scmp.ge.s32.totalorder %s604, 8
      %v609 = vphi 0.0, %v721
      %v610 = vphi 0.0, %v831
    $region56: #{tpu_custom_call.1} parent=1 // loop_header_branch
      %607 = sbr.rel (%p605) target = $region60
    $region57: #{tpu_custom_call.1} parent=1 // loop_body
      %s611 = ssub.s32 7, %s604
      %s612 = smul.u32 %s604, 2
      %s613 = scalar_lea.vmem [#allocation2], %s612
      %v614 = vld [vmem:[%s613] sm:$0x3]
      %v616 = vlaneseq
      %v617 = vshrl.u32 %v616, 7
      %v618 = vsub.s32 0, %v617
      %v619 = vrot.slane %v597, %v618
      %622 = vrot.lane.b32.xlu0 %v609, 96
      %v623 = vpop.permute.xlu0 %622
      %v624 = vsel %vm334, %v623, 0
      %626 = vmatprep.subr.mxu0 0.0
      %627 = vmatpush1.msra.mxu0 %v593
      %628 = vmatprep.subr.mxu0 0.0
      %629 = vmatpush1.msra.mxu0 %v594
      %630 = vmatprep.subr.mxu0 0.0
      %631 = vmatpush1.msra.mxu0 %v595
      %632 = vmatprep.subr.mxu0 0.0
      %633 = vmatpush1.msra.mxu0 %v596
      %634 = vmatprep.subr.mxu0 0.0
      %635 = vmatpush1.msra.mxu0 0.0
      %636 = vmatprep.subr.mxu0 0.0
      %637 = vmatpush1.msra.mxu0 0.0
      %638 = vmatprep.subr.mxu0 0.0
      %639 = vmatpush1.msra.mxu0 0.0
      %640 = vmatprep.subr.mxu0 0.0
      %641 = vmatpush1.msra.mxu0 0.0
      %642 = vmatprep.subr.mxu0 0.0
      %643 = vmatpush1.msra.mxu0 0.0
      %644 = vmatprep.subr.mxu0 0.0
      %645 = vmatpush1.msra.mxu0 0.0
      %646 = vmatprep.subr.mxu0 0.0
      %647 = vmatpush1.msra.mxu0 0.0
      %648 = vmatprep.subr.mxu0 0.0
      %649 = vmatpush1.msra.mxu0 0.0
      %650 = vmatprep.subr.mxu0 0.0
      %651 = vmatpush1.msra.mxu0 0.0
      %652 = vmatprep.subr.mxu0 0.0
      %653 = vmatpush1.msra.mxu0 0.0
      %654 = vmatprep.subr.mxu0 0.0
      %655 = vmatpush1.msra.mxu0 0.0
      %656 = vmatprep.subr.mxu0 0.0
      %657 = vmatpush1.msra.mxu0 0.0
      %658 = vmatprep.subr.mxu0 0.0
      %659 = vmatpush1.msra.mxu0 0.0
      %660 = vmatprep.subr.mxu0 0.0
      %661 = vmatpush1.msra.mxu0 0.0
      %662 = vmatprep.subr.mxu0 0.0
      %663 = vmatpush1.msra.mxu0 0.0
      %664 = vmatprep.subr.mxu0 0.0
      %665 = vmatpush1.msra.mxu0 0.0
      %666 = vmatprep.subr.mxu0 0.0
      %667 = vmatpush1.msra.mxu0 0.0
      %668 = vmatprep.subr.mxu0 0.0
      %669 = vmatpush1.msra.mxu0 0.0
      %670 = vmatprep.subr.mxu0 0.0
      %671 = vmatpush1.msra.mxu0 0.0
      %672 = vmatprep.subr.mxu0 0.0
      %673 = vmatpush1.msra.mxu0 0.0
      %674 = vmatprep.subr.mxu0 0.0
      %675 = vmatpush1.msra.mxu0 0.0
      %676 = vmatprep.subr.mxu0 0.0
      %677 = vmatpush1.msra.mxu0 0.0
      %678 = vmatprep.subr.mxu0 0.0
      %679 = vmatpush1.msra.mxu0 0.0
      %680 = vmatprep.subr.mxu0 0.0
      %681 = vmatpush1.msra.mxu0 0.0
      %682 = vmatprep.subr.mxu0 0.0
      %683 = vmatpush1.msra.mxu0 0.0
      %684 = vmatprep.subr.mxu0 0.0
      %685 = vmatpush1.msra.mxu0 0.0
      %686 = vmatprep.subr.mxu0 0.0
      %687 = vmatpush1.msra.mxu0 0.0
      %688 = vmatprep.subr.mxu0 0.0
      %689 = vmatpush1.msra.mxu0 0.0
      %690 = vmatprep.mubr.f32.mxu0 0.0
      %691 = vmatmul.mubr.f32.gmra.mrb[0].mxu0 %v624
      %v692 = vpop.f32.mrb[0].mxu0
      %v693 = vadd.f32 %v619, %v692
      %v694 = vpop.f32.mrb[0].mxu0
      %695 = vdwg.mxu0
      %v696 = vadd.f32 %v614, %v693
      %v697 = vxor.u32 %v696, 2147483648
      %v698 = vmul.f32 %v697, 1.442695
      %v699 = vpow.pop %v698
      %v700 = vadd.f32 %v699, 1.0
      %v701 = vrcp.pop %v700
      %v702 = vmul.f32 1.0, %v701
      %704 = vrot.lane.b32.xlu0 %v693, 64
      %v705 = vpop.permute.xlu0 %704
      %v707 = vmul.f32 %v702, %v705
      %709 = vrot.lane.b32.xlu0 %v707, 64
      %v710 = vpop.permute.xlu0 %709
      %v712 = vadd.f32 %v614, %v710
      %v713 = vtanh.pop %v712
      %v714 = vsub.f32 1.0, %v702
      %716 = vrot.lane.b32.xlu0 %v713, 96
      %v717 = vpop.permute.xlu0 %716
      %v719 = vmul.f32 %v714, %v717
      %v720 = vmul.f32 %v702, %v609
      %v721 = vadd.f32 %v719, %v720
      %s722 = smul.u32 %s611, 2
      %s723 = scalar_lea.vmem [#allocation3], %s722
      %v724 = vld [vmem:[%s723] sm:$0x3]
      %v726 = vlaneseq
      %v727 = vshrl.u32 %v726, 7
      %v728 = vsub.s32 0, %v727
      %v729 = vrot.slane %v602, %v728
      %732 = vrot.lane.b32.xlu0 %v610, 96
      %v733 = vpop.permute.xlu0 %732
      %v734 = vsel %vm334, %v733, 0
      %736 = vmatprep.subr.mxu0 0.0
      %737 = vmatpush1.msra.mxu0 %v598
      %738 = vmatprep.subr.mxu0 0.0
      %739 = vmatpush1.msra.mxu0 %v599
      %740 = vmatprep.subr.mxu0 0.0
      %741 = vmatpush1.msra.mxu0 %v600
      %742 = vmatprep.subr.mxu0 0.0
      %743 = vmatpush1.msra.mxu0 %v601
      %744 = vmatprep.subr.mxu0 0.0
      %745 = vmatpush1.msra.mxu0 0.0
      %746 = vmatprep.subr.mxu0 0.0
      %747 = vmatpush1.msra.mxu0 0.0
      %748 = vmatprep.subr.mxu0 0.0
      %749 = vmatpush1.msra.mxu0 0.0
      %750 = vmatprep.subr.mxu0 0.0
      %751 = vmatpush1.msra.mxu0 0.0
      %752 = vmatprep.subr.mxu0 0.0
      %753 = vmatpush1.msra.mxu0 0.0
      %754 = vmatprep.subr.mxu0 0.0
      %755 = vmatpush1.msra.mxu0 0.0
      %756 = vmatprep.subr.mxu0 0.0
      %757 = vmatpush1.msra.mxu0 0.0
      %758 = vmatprep.subr.mxu0 0.0
      %759 = vmatpush1.msra.mxu0 0.0
      %760 = vmatprep.subr.mxu0 0.0
      %761 = vmatpush1.msra.mxu0 0.0
      %762 = vmatprep.subr.mxu0 0.0
      %763 = vmatpush1.msra.mxu0 0.0
      %764 = vmatprep.subr.mxu0 0.0
      %765 = vmatpush1.msra.mxu0 0.0
      %766 = vmatprep.subr.mxu0 0.0
      %767 = vmatpush1.msra.mxu0 0.0
      %768 = vmatprep.subr.mxu0 0.0
      %769 = vmatpush1.msra.mxu0 0.0
      %770 = vmatprep.subr.mxu0 0.0
      %771 = vmatpush1.msra.mxu0 0.0
      %772 = vmatprep.subr.mxu0 0.0
      %773 = vmatpush1.msra.mxu0 0.0
      %774 = vmatprep.subr.mxu0 0.0
      %775 = vmatpush1.msra.mxu0 0.0
      %776 = vmatprep.subr.mxu0 0.0
      %777 = vmatpush1.msra.mxu0 0.0
      %778 = vmatprep.subr.mxu0 0.0
      %779 = vmatpush1.msra.mxu0 0.0
      %780 = vmatprep.subr.mxu0 0.0
      %781 = vmatpush1.msra.mxu0 0.0
      %782 = vmatprep.subr.mxu0 0.0
      %783 = vmatpush1.msra.mxu0 0.0
      %784 = vmatprep.subr.mxu0 0.0
      %785 = vmatpush1.msra.mxu0 0.0
      %786 = vmatprep.subr.mxu0 0.0
      %787 = vmatpush1.msra.mxu0 0.0
      %788 = vmatprep.subr.mxu0 0.0
      %789 = vmatpush1.msra.mxu0 0.0
      %790 = vmatprep.subr.mxu0 0.0
      %791 = vmatpush1.msra.mxu0 0.0
      %792 = vmatprep.subr.mxu0 0.0
      %793 = vmatpush1.msra.mxu0 0.0
      %794 = vmatprep.subr.mxu0 0.0
      %795 = vmatpush1.msra.mxu0 0.0
      %796 = vmatprep.subr.mxu0 0.0
      %797 = vmatpush1.msra.mxu0 0.0
      %798 = vmatprep.subr.mxu0 0.0
      %799 = vmatpush1.msra.mxu0 0.0
      %800 = vmatprep.mubr.f32.mxu0 0.0
      %801 = vmatmul.mubr.f32.gmra.mrb[0].mxu0 %v734
      %v802 = vpop.f32.mrb[0].mxu0
      %v803 = vadd.f32 %v729, %v802
      %v804 = vpop.f32.mrb[0].mxu0
      %805 = vdwg.mxu0
      %v806 = vadd.f32 %v724, %v803
      %v807 = vxor.u32 %v806, 2147483648
      %v808 = vmul.f32 %v807, 1.442695
      %v809 = vpow.pop %v808
      %v810 = vadd.f32 %v809, 1.0
      %v811 = vrcp.pop %v810
      %v812 = vmul.f32 1.0, %v811
      %814 = vrot.lane.b32.xlu0 %v803, 64
      %v815 = vpop.permute.xlu0 %814
      %v817 = vmul.f32 %v812, %v815
      %819 = vrot.lane.b32.xlu0 %v817, 64
      %v820 = vpop.permute.xlu0 %819
      %v822 = vadd.f32 %v724, %v820
      %v823 = vtanh.pop %v822
      %v824 = vsub.f32 1.0, %v812
      %826 = vrot.lane.b32.xlu0 %v823, 96
      %v827 = vpop.permute.xlu0 %826
      %v829 = vmul.f32 %v824, %v827
      %v830 = vmul.f32 %v812, %v610
      %v831 = vadd.f32 %v829, %v830
      %833 = vrot.lane.b32.xlu0 %v721, 96
      %v834 = vpop.permute.xlu0 %833
      %s836 = scalar_lea.vmem [#allocation12], %s612
      %837 = vst.msk [vmem:[%s836] sm:$0x3] %vm96, %v834
      %s838 = scalar_lea.vmem [#allocation12], %s722
      %vm839 = vcmask 517376
      %840 = vst.msk [vmem:[%s838] sm:$0x3] %vm839, %v831
    $region58: #{tpu_custom_call.1} parent=1 // loop_footer
      %s608 = sadd.s32 1, %s604
    $region59: #{tpu_custom_call.1} parent=1 // loop_footer_branch
      %603 = sbr.rel target = $region55
    $region60: #{tpu_custom_call.1} parent=1 // loop_exit
      _
    // Predicated region
    $region61: #{tpu_custom_call.1} parent=1 // pred_check
      _
    $region62: #{tpu_custom_call.1} parent=1 // pred_check_branch
      %842 = sbr.rel (0) target = $region64
    $region63: #{tpu_custom_call.1} parent=1 // pred_region
      %s844 = ssub.s32 256, 256
      %845 = vsyncadd [#allocation6], %s844
      %s846 = sshll.u32 [#allocation12], 4
      %s847 = int_to_ptr.vmem [resolvable:$true] %s846
      %852 = dma.vmem_to_hbm [thread:$0]  %s847, 256, %s9, [#allocation6], 32, 32, 2
    $region64: #{tpu_custom_call.1} parent=1 // pred_fallthru
      _
    // Predicated region
    $region65: #{tpu_custom_call.1} parent=1 // pred_check
      _
    $region66: #{tpu_custom_call.1} parent=1 // pred_check_branch
      %854 = sbr.rel (0) target = $region68
    $region67: #{tpu_custom_call.1} parent=1 // pred_region
      %855 = dma.done [#allocation6], 256
    $region68: #{tpu_custom_call.1} parent=1 // pred_fallthru
      _
    %856 = vsyncpa [#allocation5], 1
    %857 = vsyncpa [#allocation8], 1
    %858 = vsyncpa [#allocation11], 1
    %859 = vsyncpa [#allocation6], 1

</llo_original>
